<compile_context>
chip_gen: v7x
topology: tpu7x:2x2x1
jax: 0.10.0
libtpu: 0.0.40
codegen_flags: <defaults>
</compile_context>

<pallas_src>
import math

import numpy as np
import jax
import jax.numpy as jnp
from jax.experimental import pallas as pl
from jax.experimental.pallas import tpu as pltpu

_SLOPE = 0.2      # LeakyReLU negative_slope
_EPS = 1e-5       # nn.BatchNorm2d default eps


# ----------------------------------------------------------------------------
# Fused kernel.  Grid = batch blocks ("arbitrary", i.e. sequential):
#   every step   : layer-0 conv+LReLU and mid-layer-1 conv for one batch block
#                  (2 MXU pushes), pre-BN result stashed in persistent scratch.
#   last step    : full-batch BatchNorm (exact training-mode batch stats) +
#                  LReLU, any remaining mid layers, final 4x4 valid conv.
# ----------------------------------------------------------------------------
def make_fused_kernel(plan):
    block_n    = plan["block_n"]
    num_blocks = plan["num_blocks"]
    num_mid    = plan["num_mid"]
    c0         = plan["c0"]
    mid_rows   = plan["mid_rows"]     # per-block output rows of each mid layer
    mid_taps   = plan["mid_taps"]
    mid_cin    = plan["mid_cin"]
    mid_cout   = plan["mid_cout"]
    last_rows  = plan["last_rows"]    # block_n * kf * kf
    vec_rows   = plan["vec_rows"]

    n_in = 3 + 2 * num_mid + 2

    def kernel(*refs):
        in_refs   = refs[:n_in]
        o_ref     = refs[n_in]
        act_ref   = refs[n_in + 1]
        slab_refs = refs[n_in + 2:]

        p1_ref, w1_ref, vec_ref = in_refs[0:3]
        mid_refs = in_refs[3:3 + 2 * num_mid]
        wf_ref, rg_ref = in_refs[3 + 2 * num_mid:]

        i = pl.program_id(0)

        def stash(val):
            if num_blocks == 1:
                act_ref[0] = val
            else:
                act_ref[i] = val

        # ---------------- streamed per-block stage ----------------
        # Layer 0: conv-as-matmul + bias + LeakyReLU(0.2).
        y = jnp.dot(p1_ref[...], w1_ref[...], preferred_element_type=jnp.float32)
        y = y + vec_ref[0:1, :c0]
        y = jnp.maximum(y, _SLOPE * y)              # LReLU without a compare

        if num_mid >= 1:
            # Mid layer 1: stride-2 conv as 2 MXU pushes.  Conv bias dropped:
            # BatchNorm's batch-mean subtraction cancels it exactly.
            s_ref, wcat_ref = mid_refs[0], mid_refs[1]
            slab_ref = slab_refs[0]
            taps, rows, cin = mid_taps[0], mid_rows[0], mid_cin[0]
            g = jnp.dot(s_ref[...], y, preferred_element_type=jnp.float32)
            for t in range(taps):                   # static: tiny lane-slice stores
                slab_ref[:, t * cin:(t + 1) * cin] = g[t * rows:(t + 1) * rows, :]
            pre = jnp.dot(slab_ref[...], wcat_ref[...],
                          preferred_element_type=jnp.float32)
            stash(pre)                              # pre-BN block result
        else:
            stash(y)

        # ------------- tail: full-batch BN + remaining layers -------------
        @pl.when(i == num_blocks - 1)
        def _():
            if num_blocks == 1:
                a = act_ref[0]
            else:
                a = jnp.concatenate([act_ref[b] for b in range(num_blocks)], axis=0)

            def batchnorm_lrelu(x, j):
                # PyTorch training-mode BN: biased batch variance over (N, H, W).
                c = mid_cout[j]
                gr, br = vec_rows["gamma"][j], vec_rows["beta"][j]
                mean = jnp.mean(x, axis=0, keepdims=True)
                var = jnp.mean(jnp.square(x - mean), axis=0, keepdims=True)
                xh = (x - mean) * jax.lax.rsqrt(var + _EPS)
                xh = xh * vec_ref[gr:gr + 1, :c] + vec_ref[br:br + 1, :c]
                return jnp.maximum(xh, _SLOPE * xh)

            if num_mid >= 1:
                a = batchnorm_lrelu(a, 0)

            # Remaining BatchNorm'd mid layers (none for image_size=16); the
            # per-block selection constants are reused block by block, so this
            # path also stays O(N).
            for j in range(1, num_mid):
                s_ref, wcat_ref = mid_refs[2 * j], mid_refs[2 * j + 1]
                slab_ref = slab_refs[j]
                taps, rows, cin = mid_taps[j], mid_rows[j], mid_cin[j]
                rows_prev = mid_rows[j - 1]
                pres = []
                for b in range(num_blocks):
                    yb = a[b * rows_prev:(b + 1) * rows_prev, :]
                    g = jnp.dot(s_ref[...], yb, preferred_element_type=jnp.float32)
                    for t in range(taps):
                        slab_ref[:, t * cin:(t + 1) * cin] = g[t * rows:(t + 1) * rows, :]
                    pres.append(jnp.dot(slab_ref[...], wcat_ref[...],
                                        preferred_element_type=jnp.float32))
                a = pres[0] if num_blocks == 1 else jnp.concatenate(pres, axis=0)
                a = batchnorm_lrelu(a, j)

            # Final kf x kf valid conv, Cout = 1: per-sample full contraction
            # (elementwise mul, block-local row-group matmul, lane reduce).
            bf = vec_ref[vec_rows["bf"]:vec_rows["bf"] + 1, 0:1]
            for b in range(num_blocks):
                yb = a[b * last_rows:(b + 1) * last_rows, :]
                prod = yb * wf_ref[...]
                z = jnp.dot(rg_ref[...], prod, preferred_element_type=jnp.float32)
                res = jnp.sum(z, axis=1, keepdims=True) + bf
                # TODO(synk): lane-dense (1, N) output layout deferred — the
                # output is written once per call, negligible at these sizes.
                o_ref[b * block_n:(b + 1) * block_n, :] = res.astype(o_ref.dtype)

    return kernel


# ----------------------------------------------------------------------------
# Wrapper-side constants (im2col of the raw input, per-BLOCK selection matrices)
# ----------------------------------------------------------------------------
def im2col(x_nhwc, k, stride, pad):
    """Patch extraction for the FIRST layer only (raw input).  Rows are
    batch-major so a slice of block_n*Ho*Wo rows is exactly one batch block."""
    n, h, w, c = x_nhwc.shape
    xp = jnp.pad(x_nhwc, ((0, 0), (pad, pad), (pad, pad), (0, 0)))
    ho = (h + 2 * pad - k) // stride + 1
    wo = (w + 2 * pad - k) // stride + 1
    cols = []
    for i in range(k):
        for j in range(k):
            cols.append(xp[:, i:i + stride * ho:stride, j:j + stride * wo:stride, :])
    patches = jnp.stack(cols, axis=3)                    # (N, Ho, Wo, K*K, C)
    return patches.reshape(n * ho * wo, k * k * c), ho, wo


def build_block_selection(block_n, h, w, k, stride, pad):
    """Stacked 0/1 selection for ONE batch block: tap t gathers rows of the
    block's (block_n*H*W, C) activation.  Shape (k*k*block_n*Ho*Wo,
    block_n*H*W) -> fixed size, independent of total batch (replaces the
    previous O(N^2) whole-batch selection matrices)."""
    ho = (h + 2 * pad - k) // stride + 1
    wo = (w + 2 * pad - k) // stride + 1
    m = ho * wo
    S = np.zeros((k * k, block_n * m, block_n * h * w), np.float32)
    for ti in range(k):
        for tj in range(k):
            t = ti * k + tj
            for b in range(block_n):
                for oh in range(ho):
                    for ow in range(wo):
                        hh = oh * stride + ti - pad
                        ww = ow * stride + tj - pad
                        if 0 <= hh < h and 0 <= ww < w:   # zero padding -> row stays 0
                            S[t, b * m + oh * wo + ow, b * h * w + hh * w + ww] = 1.0
    return jnp.asarray(S.reshape(k * k * block_n * m, block_n * h * w)), ho, wo


def build_block_rowgroup(block_n, group):
    """(block_n, block_n*group) matrix summing each sample's `group` rows
    (block-local; previously O(N^2))."""
    R = np.zeros((block_n, block_n * group), np.float32)
    for b in range(block_n):
        R[b, b * group:(b + 1) * group] = 1.0
    return jnp.asarray(R)


# ----------------------------------------------------------------------------
# Model construction (mirrors the PyTorch __init__ exactly)
# ----------------------------------------------------------------------------
def build_dsc(key, image_size, image_channels, base_channels, kernel_size):
    bc = base_channels
    final_layer = dict(cin=bc, cout=1, k=4, stride=1, pad=0, bn=False, lrelu=False)
    mids = []
    for _ in range(round(math.log2(image_size / 4) - 1)):
        mids.append(dict(cin=bc // 2, cout=bc, k=kernel_size, stride=2,
                         pad=kernel_size // 2, bn=True, lrelu=True))
        bc //= 2
    first_layer = dict(cin=image_channels, cout=bc, k=kernel_size, stride=2,
                       pad=kernel_size // 2, bn=False, lrelu=True)
    assert bc >= 8
    # nn.Sequential(*reversed(layers)) forward order:
    cfg = [first_layer] + list(reversed(mids)) + [final_layer]

    params = []
    for layer in cfg:
        key, kw_, kb_ = jax.random.split(key, 3)
        # weights_init: N(0, 0.02) for conv weights; PyTorch-default bias init.
        w = 0.02 * jax.random.normal(
            kw_, (layer["k"], layer["k"], layer["cin"], layer["cout"]), jnp.float32)
        bound = 1.0 / math.sqrt(layer["cin"] * layer["k"] * layer["k"])
        b = jax.random.uniform(kb_, (layer["cout"],), jnp.float32, -bound, bound)
        p = dict(w=w, b=b)
        if layer["bn"]:
            p["gamma"] = jnp.ones((layer["cout"],), jnp.float32)
            p["beta"] = jnp.zeros((layer["cout"],), jnp.float32)
        params.append(p)
    return params, cfg


# ----------------------------------------------------------------------------
# Forward: one pallas_call, batch-block grid
# ----------------------------------------------------------------------------
def dsc_forward(x_nchw, params, cfg, max_block=8):
    n = x_nchw.shape[0]
    x = jnp.transpose(x_nchw, (0, 2, 3, 1)).astype(jnp.float32)   # NHWC
    first, mids, final = cfg[0], cfg[1:-1], cfg[-1]
    num_mid = len(mids)
    c0 = first["cout"]

    # Batch-block size: largest divisor of N that is <= max_block (no batch
    # padding -> full-batch BatchNorm statistics stay exact).  max_block=8
    # keeps the per-block selection stack ~2.3 MB: well inside v7x's 64 MiB
    # physical / 32 MiB scoped VMEM even with the double-buffered patch slab.
    block_n = max(d for d in range(1, min(n, max_block) + 1) if n % d == 0)
    num_blocks = n // block_n

    # First layer's im2col on the raw input (tiny, one XLA fusion pre-kernel).
    p1, h, w = im2col(x, first["k"], first["stride"], first["pad"])
    block_rows0 = block_n * h * w

    # --- pack all tiny per-layer vectors into ONE (rows, Cmax) VMEM input ----
    cmax = max([c0] + [ml["cout"] for ml in mids] + [8])

    def pad_row(v):
        v = jnp.asarray(v, jnp.float32).reshape(1, -1)
        return jnp.pad(v, ((0, 0), (0, cmax - v.shape[1])))

    vec_rows = {"gamma": [], "beta": []}
    vec_list = [pad_row(params[0]["b"])]                  # row 0: first-layer bias
    r = 1
    for li in range(1, 1 + num_mid):
        vec_rows["gamma"].append(r); vec_list.append(pad_row(params[li]["gamma"])); r += 1
        vec_rows["beta"].append(r);  vec_list.append(pad_row(params[li]["beta"]));  r += 1
    vec_rows["bf"] = r
    vec_list.append(pad_row(params[-1]["b"]))             # last row: final-layer bias
    vecs = jnp.concatenate(vec_list, axis=0)

    # TODO(synk): for very large batches on v5e, cast the MXU operands
    # (p1 / S / weights and in-kernel activations) to bf16 with f32 accumulate;
    # irrelevant at these sizes.
    inputs = [p1, params[0]["w"].reshape(-1, c0), vecs]
    flops = 2.0 * p1.shape[0] * p1.shape[1] * c0

    mid_rows, mid_taps, mid_cin, mid_cout = [], [], [], []
    for li, layer in enumerate(mids, start=1):
        k, s, pad = layer["k"], layer["stride"], layer["pad"]
        S, ho, wo = build_block_selection(block_n, h, w, k, s, pad)
        wcat = params[li]["w"].reshape(k * k * layer["cin"], layer["cout"])
        # Conv bias intentionally NOT passed: BN's batch-mean subtraction
        # cancels it exactly (forward semantics unchanged).
        inputs += [S, wcat]
        rows = block_n * ho * wo
        mid_rows.append(rows); mid_taps.append(k * k)
        mid_cin.append(layer["cin"]); mid_cout.append(layer["cout"])
        flops += num_blocks * (2.0 * S.shape[0] * S.shape[1] * layer["cin"]
                               + 2.0 * rows * k * k * layer["cin"] * layer["cout"])
        h, w = ho, wo

    kf, c_last = final["k"], final["cin"]
    assert h == kf and w == kf, "final valid conv must consume the full map"
    wf_blk = jnp.tile(params[-1]["w"].reshape(kf * kf, c_last), (block_n, 1))
    rg_blk = build_block_rowgroup(block_n, kf * kf)
    inputs += [wf_blk, rg_blk]
    flops += n * kf * kf * c_last + num_blocks * 2.0 * block_n * block_n * kf * kf * c_last

    plan = dict(block_n=block_n, num_blocks=num_blocks, num_mid=num_mid, c0=c0,
                mid_rows=mid_rows, mid_taps=mid_taps, mid_cin=mid_cin,
                mid_cout=mid_cout, last_rows=block_n * kf * kf, vec_rows=vec_rows)

    # ---- BlockSpecs: only the patch slab moves with the grid ----------------
    def invariant_spec(a):
        nd = a.ndim
        return pl.BlockSpec(a.shape, lambda i, _nd=nd: (0,) * _nd)

    in_specs = [pl.BlockSpec((block_rows0, p1.shape[1]), lambda i: (i, 0))]
    in_specs += [invariant_spec(a) for a in inputs[1:]]
    out_specs = pl.BlockSpec((n, 1), lambda i: (0, 0))

    if num_mid >= 1:
        act_shape = (num_blocks, mid_rows[0], mid_cout[0])
    else:
        act_shape = (num_blocks, block_rows0, c0)
    scratch_shapes = [pltpu.VMEM(act_shape, jnp.float32)]
    scratch_shapes += [pltpu.VMEM((mid_rows[j], mid_taps[j] * mid_cin[j]), jnp.float32)
                       for j in range(num_mid)]

    bytes_accessed = sum(int(a.size) * 4 for a in inputs) + n * 4

    out = pl.pallas_call(
        make_fused_kernel(plan),
        out_shape=jax.ShapeDtypeStruct((n, 1), jnp.float32),
        grid_spec=pltpu.PrefetchScalarGridSpec(
            num_scalar_prefetch=0,
            grid=(num_blocks,),
            in_specs=in_specs,
            out_specs=out_specs,
            scratch_shapes=scratch_shapes),
        compiler_params=pltpu.CompilerParams(
            # Sequential grid: BatchNorm needs full-batch statistics (pre-BN
            # activations accumulate in persistent scratch, normalized on the
            # last step).  TODO(synk): "parallel"/megacore batch grid needs a
            # two-pass BN-stats scheme; deferred.
            dimension_semantics=("arbitrary",),
            vmem_limit_bytes=32 * 1024 * 1024),
        cost_estimate=pl.CostEstimate(flops=int(flops),
                                      transcendentals=int(num_mid * cmax),
                                      bytes_accessed=int(bytes_accessed)),
    )(*inputs)
    # final conv gives (N, 1) -> view(N)
    return out.reshape(n)


# ----------------------------------------------------------------------------
# Pure-JAX reference (PyTorch semantics, training-mode BN) for validation
# ----------------------------------------------------------------------------
def dsc_reference(x_nchw, params, cfg):
    y = x_nchw.astype(jnp.float32)
    for li, layer in enumerate(cfg):
        y = jax.lax.conv_general_dilated(
            y, params[li]["w"],
            window_strides=(layer["stride"], layer["stride"]),
            padding=[(layer["pad"], layer["pad"])] * 2,
            dimension_numbers=("NCHW", "HWIO", "NCHW"),
            precision=jax.lax.Precision.HIGHEST)
        y = y + params[li]["b"].reshape(1, -1, 1, 1)
        if layer["bn"]:
            mean = jnp.mean(y, axis=(0, 2, 3), keepdims=True)
            var = jnp.mean(jnp.square(y - mean), axis=(0, 2, 3), keepdims=True)
            y = (y - mean) * jax.lax.rsqrt(var + _EPS)
            y = (y * params[li]["gamma"].reshape(1, -1, 1, 1)
                 + params[li]["beta"].reshape(1, -1, 1, 1))
        if layer["lrelu"]:
            y = jnp.maximum(y, _SLOPE * y)
    return y.reshape(y.shape[0])


# ----------------------------------------------------------------------------
if __name__ == "__main__":
    image_size, image_channels, base_channels, kernel_size = 16, 4, 16, 3
    batch = 2

    key = jax.random.PRNGKey(0)
    kparams, kx = jax.random.split(key)
    params, cfg = build_dsc(kparams, image_size, image_channels,
                            base_channels, kernel_size)
    x = jax.random.normal(kx, (batch, image_channels, image_size, image_size),
                          jnp.float32)

    fwd = jax.jit(lambda inp: dsc_forward(inp, params, cfg))
    out = jax.block_until_ready(fwd(x))
    assert out.shape == (batch,), out.shape
    assert out.dtype == jnp.float32

    ref = jax.block_until_ready(
        jax.jit(lambda inp: dsc_reference(inp, params, cfg))(x))
    np.testing.assert_allclose(np.asarray(out), np.asarray(ref),
                               rtol=2e-2, atol=2e-2)

    print("KERNEL_OK")
</pallas_src>

<mosaic_0001>
module attributes {stable_mosaic.version = 11 : i64} {
  func.func @kernel(%arg0: i32, %arg1: memref<128x36xf32, #tpu.memory_space<vmem>>, %arg2: memref<36x8xf32, #tpu.memory_space<vmem>>, %arg3: memref<4x16xf32, #tpu.memory_space<vmem>>, %arg4: memref<288x128xf32, #tpu.memory_space<vmem>>, %arg5: memref<72x16xf32, #tpu.memory_space<vmem>>, %arg6: memref<32x16xf32, #tpu.memory_space<vmem>>, %arg7: memref<2x32xf32, #tpu.memory_space<vmem>>, %arg8: memref<2x1xf32, #tpu.memory_space<vmem>>, %arg9: memref<1x32x16xf32, #tpu.memory_space<vmem>>, %arg10: memref<32x72xf32, #tpu.memory_space<vmem>>) attributes {dimension_semantics = [#tpu.dimension_semantics<arbitrary>], iteration_bounds = array<i64: 1>, scalar_prefetch = 0 : i64, scratch_operands = 2 : i64, tpu.core_type = #tpu.core_type<tc>, window_params = [{transform_indices = @transform_0, window_bounds = array<i64: 128, 36>}, {pipeline_mode = #tpu.pipeline_mode<synchronous>, transform_indices = @transform_1, window_bounds = array<i64: 36, 8>}, {pipeline_mode = #tpu.pipeline_mode<synchronous>, transform_indices = @transform_2, window_bounds = array<i64: 4, 16>}, {pipeline_mode = #tpu.pipeline_mode<synchronous>, transform_indices = @transform_3, window_bounds = array<i64: 288, 128>}, {pipeline_mode = #tpu.pipeline_mode<synchronous>, transform_indices = @transform_4, window_bounds = array<i64: 72, 16>}, {pipeline_mode = #tpu.pipeline_mode<synchronous>, transform_indices = @transform_5, window_bounds = array<i64: 32, 16>}, {pipeline_mode = #tpu.pipeline_mode<synchronous>, transform_indices = @transform_6, window_bounds = array<i64: 2, 32>}, {pipeline_mode = #tpu.pipeline_mode<synchronous>, transform_indices = @transform_7, window_bounds = array<i64: 2, 1>}]} {
    %c0 = arith.constant 0 : index
    %c0_0 = arith.constant 0 : index
    %0 = vector.load %arg1[%c0, %c0_0] : memref<128x36xf32, #tpu.memory_space<vmem>>, vector<128x36xf32>
    %c0_1 = arith.constant 0 : index
    %c0_2 = arith.constant 0 : index
    %1 = vector.load %arg2[%c0_1, %c0_2] : memref<36x8xf32, #tpu.memory_space<vmem>>, vector<36x8xf32>
    %cst = arith.constant dense<0.000000e+00> : vector<128x8xf32>
    %2 = tpu.matmul %0, %1, %cst {dimension_numbers = #tpu.dot_dimension_numbers<[1], [0], [0], [1], [0, 0, 1, 1], [], []>} : vector<128x36xf32>, vector<36x8xf32>, vector<128x8xf32> -> vector<128x8xf32>
    %c0_3 = arith.constant 0 : index
    %c0_4 = arith.constant 0 : index
    %3 = vector.load %arg3[%c0_3, %c0_4] : memref<4x16xf32, #tpu.memory_space<vmem>>, vector<1x8xf32>
    %4 = vector.broadcast %3 : vector<1x8xf32> to vector<128x8xf32>
    %5 = arith.addf %2, %4 : vector<128x8xf32>
    %cst_5 = arith.constant 2.000000e-01 : f32
    %6 = vector.broadcast %cst_5 : f32 to vector<128x8xf32>
    %7 = arith.mulf %6, %5 : vector<128x8xf32>
    %8 = arith.maximumf %5, %7 : vector<128x8xf32>
    %c0_6 = arith.constant 0 : index
    %c0_7 = arith.constant 0 : index
    %9 = vector.load %arg4[%c0_6, %c0_7] : memref<288x128xf32, #tpu.memory_space<vmem>>, vector<288x128xf32>
    %cst_8 = arith.constant dense<0.000000e+00> : vector<288x8xf32>
    %10 = tpu.matmul %9, %8, %cst_8 {dimension_numbers = #tpu.dot_dimension_numbers<[1], [0], [0], [1], [0, 0, 1, 1], [], []>} : vector<288x128xf32>, vector<128x8xf32>, vector<288x8xf32> -> vector<288x8xf32>
    %11 = vector.extract_strided_slice %10 {offsets = [0, 0], sizes = [32, 8], strides = [1, 1]} : vector<288x8xf32> to vector<32x8xf32>
    %c0_9 = arith.constant 0 : index
    %c0_10 = arith.constant 0 : index
    %12 = vector.load %arg10[%c0_9, %c0_10] : memref<32x72xf32, #tpu.memory_space<vmem>>, vector<32x8xf32>
    tpu.vector_store %arg10[%c0_9, %c0_10], %11 {strides = array<i32>} : memref<32x72xf32, #tpu.memory_space<vmem>>, vector<32x8xf32>,
    %13 = vector.extract_strided_slice %10 {offsets = [32, 0], sizes = [32, 8], strides = [1, 1]} : vector<288x8xf32> to vector<32x8xf32>
    %c0_11 = arith.constant 0 : index
    %c8 = arith.constant 8 : index
    %14 = vector.load %arg10[%c0_11, %c8] : memref<32x72xf32, #tpu.memory_space<vmem>>, vector<32x8xf32>
    tpu.vector_store %arg10[%c0_11, %c8], %13 {strides = array<i32>} : memref<32x72xf32, #tpu.memory_space<vmem>>, vector<32x8xf32>,
    %15 = vector.extract_strided_slice %10 {offsets = [64, 0], sizes = [32, 8], strides = [1, 1]} : vector<288x8xf32> to vector<32x8xf32>
    %c0_12 = arith.constant 0 : index
    %c16 = arith.constant 16 : index
    %16 = vector.load %arg10[%c0_12, %c16] : memref<32x72xf32, #tpu.memory_space<vmem>>, vector<32x8xf32>
    tpu.vector_store %arg10[%c0_12, %c16], %15 {strides = array<i32>} : memref<32x72xf32, #tpu.memory_space<vmem>>, vector<32x8xf32>,
    %17 = vector.extract_strided_slice %10 {offsets = [96, 0], sizes = [32, 8], strides = [1, 1]} : vector<288x8xf32> to vector<32x8xf32>
    %c0_13 = arith.constant 0 : index
    %c24 = arith.constant 24 : index
    %18 = vector.load %arg10[%c0_13, %c24] : memref<32x72xf32, #tpu.memory_space<vmem>>, vector<32x8xf32>
    tpu.vector_store %arg10[%c0_13, %c24], %17 {strides = array<i32>} : memref<32x72xf32, #tpu.memory_space<vmem>>, vector<32x8xf32>,
    %19 = vector.extract_strided_slice %10 {offsets = [128, 0], sizes = [32, 8], strides = [1, 1]} : vector<288x8xf32> to vector<32x8xf32>
    %c0_14 = arith.constant 0 : index
    %c32 = arith.constant 32 : index
    %20 = vector.load %arg10[%c0_14, %c32] : memref<32x72xf32, #tpu.memory_space<vmem>>, vector<32x8xf32>
    tpu.vector_store %arg10[%c0_14, %c32], %19 {strides = array<i32>} : memref<32x72xf32, #tpu.memory_space<vmem>>, vector<32x8xf32>,
    %21 = vector.extract_strided_slice %10 {offsets = [160, 0], sizes = [32, 8], strides = [1, 1]} : vector<288x8xf32> to vector<32x8xf32>
    %c0_15 = arith.constant 0 : index
    %c40 = arith.constant 40 : index
    %22 = vector.load %arg10[%c0_15, %c40] : memref<32x72xf32, #tpu.memory_space<vmem>>, vector<32x8xf32>
    tpu.vector_store %arg10[%c0_15, %c40], %21 {strides = array<i32>} : memref<32x72xf32, #tpu.memory_space<vmem>>, vector<32x8xf32>,
    %23 = vector.extract_strided_slice %10 {offsets = [192, 0], sizes = [32, 8], strides = [1, 1]} : vector<288x8xf32> to vector<32x8xf32>
    %c0_16 = arith.constant 0 : index
    %c48 = arith.constant 48 : index
    %24 = vector.load %arg10[%c0_16, %c48] : memref<32x72xf32, #tpu.memory_space<vmem>>, vector<32x8xf32>
    tpu.vector_store %arg10[%c0_16, %c48], %23 {strides = array<i32>} : memref<32x72xf32, #tpu.memory_space<vmem>>, vector<32x8xf32>,
    %25 = vector.extract_strided_slice %10 {offsets = [224, 0], sizes = [32, 8], strides = [1, 1]} : vector<288x8xf32> to vector<32x8xf32>
    %c0_17 = arith.constant 0 : index
    %c56 = arith.constant 56 : index
    %26 = vector.load %arg10[%c0_17, %c56] : memref<32x72xf32, #tpu.memory_space<vmem>>, vector<32x8xf32>
    tpu.vector_store %arg10[%c0_17, %c56], %25 {strides = array<i32>} : memref<32x72xf32, #tpu.memory_space<vmem>>, vector<32x8xf32>,
    %27 = vector.extract_strided_slice %10 {offsets = [256, 0], sizes = [32, 8], strides = [1, 1]} : vector<288x8xf32> to vector<32x8xf32>
    %c0_18 = arith.constant 0 : index
    %c64 = arith.constant 64 : index
    %28 = vector.load %arg10[%c0_18, %c64] : memref<32x72xf32, #tpu.memory_space<vmem>>, vector<32x8xf32>
    tpu.vector_store %arg10[%c0_18, %c64], %27 {strides = array<i32>} : memref<32x72xf32, #tpu.memory_space<vmem>>, vector<32x8xf32>,
    %c0_19 = arith.constant 0 : index
    %c0_20 = arith.constant 0 : index
    %29 = vector.load %arg10[%c0_19, %c0_20] : memref<32x72xf32, #tpu.memory_space<vmem>>, vector<32x72xf32>
    %c0_21 = arith.constant 0 : index
    %c0_22 = arith.constant 0 : index
    %30 = vector.load %arg5[%c0_21, %c0_22] : memref<72x16xf32, #tpu.memory_space<vmem>>, vector<72x16xf32>
    %cst_23 = arith.constant dense<0.000000e+00> : vector<32x16xf32>
    %31 = tpu.matmul %29, %30, %cst_23 {dimension_numbers = #tpu.dot_dimension_numbers<[1], [0], [0], [1], [0, 0, 1, 1], [], []>} : vector<32x72xf32>, vector<72x16xf32>, vector<32x16xf32> -> vector<32x16xf32>
    %c0_24 = arith.constant 0 : index
    %c0_25 = arith.constant 0 : index
    %c0_26 = arith.constant 0 : index
    %32 = vector.load %arg9[%c0_24, %c0_25, %c0_26] : memref<1x32x16xf32, #tpu.memory_space<vmem>>, vector<1x32x16xf32>
    %33 = vector.shape_cast %32 : vector<1x32x16xf32> to vector<32x16xf32>
    %34 = vector.shape_cast %31 : vector<32x16xf32> to vector<1x32x16xf32>
    tpu.vector_store %arg9[%c0_24, %c0_25, %c0_26], %34 {strides = array<i32>} : memref<1x32x16xf32, #tpu.memory_space<vmem>>, vector<1x32x16xf32>,
    %c0_i32 = arith.constant 0 : i32
    %35 = arith.cmpi eq, %arg0, %c0_i32 : i32
    %36 = arith.extui %35 : i1 to i32
    %c0_i32_27 = arith.constant 0 : i32
    %37 = arith.cmpi ne, %36, %c0_i32_27 : i32
    scf.if %37 {
      %c0_28 = arith.constant 0 : index
      %c0_29 = arith.constant 0 : index
      %c0_30 = arith.constant 0 : index
      %38 = vector.load %arg9[%c0_28, %c0_29, %c0_30] : memref<1x32x16xf32, #tpu.memory_space<vmem>>, vector<1x32x16xf32>
      %39 = vector.shape_cast %38 : vector<1x32x16xf32> to vector<32x16xf32>
      %cst_31 = arith.constant dense<0.000000e+00> : vector<16xf32>
      %40 = vector.multi_reduction <add>, %39, %cst_31 [0] : vector<32x16xf32> to vector<16xf32>
      %41 = vector.shape_cast %40 : vector<16xf32> to vector<1x16xf32>
      %cst_32 = arith.constant 3.200000e+01 : f32
      %42 = vector.broadcast %cst_32 : f32 to vector<1x16xf32>
      %43 = arith.divf %41, %42 : vector<1x16xf32>
      %44 = vector.broadcast %43 : vector<1x16xf32> to vector<32x16xf32>
      %45 = arith.subf %39, %44 : vector<32x16xf32>
      %46 = arith.mulf %45, %45 : vector<32x16xf32>
      %cst_33 = arith.constant dense<0.000000e+00> : vector<16xf32>
      %47 = vector.multi_reduction <add>, %46, %cst_33 [0] : vector<32x16xf32> to vector<16xf32>
      %48 = vector.shape_cast %47 : vector<16xf32> to vector<1x16xf32>
      %cst_34 = arith.constant 3.200000e+01 : f32
      %49 = vector.broadcast %cst_34 : f32 to vector<1x16xf32>
      %50 = arith.divf %48, %49 : vector<1x16xf32>
      %51 = vector.broadcast %43 : vector<1x16xf32> to vector<32x16xf32>
      %52 = arith.subf %39, %51 : vector<32x16xf32>
      %cst_35 = arith.constant 9.99999974E-6 : f32
      %53 = vector.broadcast %cst_35 : f32 to vector<1x16xf32>
      %54 = arith.addf %50, %53 : vector<1x16xf32>
      %55 = math.rsqrt %54 : vector<1x16xf32>
      %56 = vector.broadcast %55 : vector<1x16xf32> to vector<32x16xf32>
      %57 = arith.mulf %52, %56 : vector<32x16xf32>
      %c1 = arith.constant 1 : index
      %c0_36 = arith.constant 0 : index
      %58 = vector.load %arg3[%c1, %c0_36] : memref<4x16xf32, #tpu.memory_space<vmem>>, vector<1x16xf32>
      %59 = vector.broadcast %58 : vector<1x16xf32> to vector<32x16xf32>
      %60 = arith.mulf %57, %59 : vector<32x16xf32>
      %c2 = arith.constant 2 : index
      %c0_37 = arith.constant 0 : index
      %61 = vector.load %arg3[%c2, %c0_37] : memref<4x16xf32, #tpu.memory_space<vmem>>, vector<1x16xf32>
      %62 = vector.broadcast %61 : vector<1x16xf32> to vector<32x16xf32>
      %63 = arith.addf %60, %62 : vector<32x16xf32>
      %cst_38 = arith.constant 2.000000e-01 : f32
      %64 = vector.broadcast %cst_38 : f32 to vector<32x16xf32>
      %65 = arith.mulf %64, %63 : vector<32x16xf32>
      %66 = arith.maximumf %63, %65 : vector<32x16xf32>
      %c3 = arith.constant 3 : index
      %c0_39 = arith.constant 0 : index
      %67 = vector.load %arg3[%c3, %c0_39] : memref<4x16xf32, #tpu.memory_space<vmem>>, vector<1x1xf32>
      %c0_40 = arith.constant 0 : index
      %c0_41 = arith.constant 0 : index
      %68 = vector.load %arg6[%c0_40, %c0_41] : memref<32x16xf32, #tpu.memory_space<vmem>>, vector<32x16xf32>
      %69 = arith.mulf %66, %68 : vector<32x16xf32>
      %c0_42 = arith.constant 0 : index
      %c0_43 = arith.constant 0 : index
      %70 = vector.load %arg7[%c0_42, %c0_43] : memref<2x32xf32, #tpu.memory_space<vmem>>, vector<2x32xf32>
      %cst_44 = arith.constant dense<0.000000e+00> : vector<2x16xf32>
      %71 = tpu.matmul %70, %69, %cst_44 {dimension_numbers = #tpu.dot_dimension_numbers<[1], [0], [0], [1], [0, 0, 1, 1], [], []>} : vector<2x32xf32>, vector<32x16xf32>, vector<2x16xf32> -> vector<2x16xf32>
      %cst_45 = arith.constant dense<0.000000e+00> : vector<2xf32>
      %72 = vector.multi_reduction <add>, %71, %cst_45 [1] : vector<2x16xf32> to vector<2xf32>
      %73 = vector.shape_cast %72 : vector<2xf32> to vector<2x1xf32>
      %74 = vector.broadcast %67 : vector<1x1xf32> to vector<2x1xf32>
      %75 = arith.addf %73, %74 : vector<2x1xf32>
      %c0_46 = arith.constant 0 : index
      %c0_47 = arith.constant 0 : index
      %76 = vector.load %arg8[%c0_46, %c0_47] : memref<2x1xf32, #tpu.memory_space<vmem>>, vector<2x1xf32>
      tpu.vector_store %arg8[%c0_46, %c0_47], %75 {strides = array<i32>} : memref<2x1xf32, #tpu.memory_space<vmem>>, vector<2x1xf32>,
    } else {
    }
    return
  }
  func.func @transform_0(%arg0: i32) -> (i32, i32) {
    %c0_i32 = arith.constant 0 : i32
    %c0_i32_0 = arith.constant 0 : i32
    return %arg0, %c0_i32 : i32, i32
  }
  func.func @transform_1(%arg0: i32) -> (i32, i32) {
    %c0_i32 = arith.constant 0 : i32
    %c0_i32_0 = arith.constant 0 : i32
    %c0_i32_1 = arith.constant 0 : i32
    return %c0_i32, %c0_i32_0 : i32, i32
  }
  func.func @transform_2(%arg0: i32) -> (i32, i32) {
    %c0_i32 = arith.constant 0 : i32
    %c0_i32_0 = arith.constant 0 : i32
    %c0_i32_1 = arith.constant 0 : i32
    return %c0_i32, %c0_i32_0 : i32, i32
  }
  func.func @transform_3(%arg0: i32) -> (i32, i32) {
    %c0_i32 = arith.constant 0 : i32
    %c0_i32_0 = arith.constant 0 : i32
    %c0_i32_1 = arith.constant 0 : i32
    return %c0_i32, %c0_i32_0 : i32, i32
  }
  func.func @transform_4(%arg0: i32) -> (i32, i32) {
    %c0_i32 = arith.constant 0 : i32
    %c0_i32_0 = arith.constant 0 : i32
    %c0_i32_1 = arith.constant 0 : i32
    return %c0_i32, %c0_i32_0 : i32, i32
  }
  func.func @transform_5(%arg0: i32) -> (i32, i32) {
    %c0_i32 = arith.constant 0 : i32
    %c0_i32_0 = arith.constant 0 : i32
    %c0_i32_1 = arith.constant 0 : i32
    return %c0_i32, %c0_i32_0 : i32, i32
  }
  func.func @transform_6(%arg0: i32) -> (i32, i32) {
    %c0_i32 = arith.constant 0 : i32
    %c0_i32_0 = arith.constant 0 : i32
    %c0_i32_1 = arith.constant 0 : i32
    return %c0_i32, %c0_i32_0 : i32, i32
  }
  func.func @transform_7(%arg0: i32) -> (i32, i32) {
    %c0_i32 = arith.constant 0 : i32
    %c0_i32_0 = arith.constant 0 : i32
    %c0_i32_1 = arith.constant 0 : i32
    return %c0_i32, %c0_i32_0 : i32, i32
  }
}

</mosaic_0001>

<llo_original>
// kernel: _lambda_.1
$region0: #{_lambda_.1}
  #allocation0 [shape = 'u32[]', space=smem, size = 0x4, offset = 0x4, fixed_abs, tag = 'smem constant byte address 0x4 - core index']
  #allocation1 [shape = 'u32[144,128]{1,0:T(1,128)}', space=vmem, size = 0x12000, scoped, tag = 'internal scratch']
  #allocation2 [shape = 'f32[1,32,16]{2,1,0:T(8,128)}', space=vmem, size = 0x4000, scoped, tag = 'scratch operand']
  #allocation3 [shape = 'f32[32,72]{1,0:T(8,128)}', space=vmem, size = 0x4000, scoped, tag = 'scratch operand']
  %s0 = inlined_call_operand.vmem [shape: f32[128,36], index: 0, kind: input, shape index: {}]
  %s1 = inlined_call_operand.vmem [shape: f32[36,8], index: 1, kind: input, shape index: {}]
  %s2 = inlined_call_operand.vmem [shape: f32[4,16], index: 2, kind: input, shape index: {}]
  %s3 = inlined_call_operand.vmem [shape: f32[288,128], index: 3, kind: input, shape index: {}]
  %s4 = inlined_call_operand.vmem [shape: f32[72,16], index: 4, kind: input, shape index: {}]
  %s5 = inlined_call_operand.vmem [shape: f32[32,16], index: 5, kind: input, shape index: {}]
  %s6 = inlined_call_operand.vmem [shape: f32[2,32], index: 6, kind: input, shape index: {}]
  %s7 = inlined_call_operand.vmem [shape: f32[2,1], index: 7, kind: output, shape index: {}]
  %s8 = sld [smem:[#allocation0]]
  $region42: #{_lambda_.1} parent=0
    _
  %s10 = ssub.s32 1, %s8
  %s11 = scalar_select 0, %s10, %s8
  // Predicated region
  $region2: #{_lambda_.1} parent=0 // pred_check
    _
  $region3: #{_lambda_.1} parent=0 // pred_check_branch
    %13 = sbr.rel (0) target = $region5
  $region4: #{_lambda_.1} parent=0 // pred_region
    _
  $region5: #{_lambda_.1} parent=0 // pred_fallthru
    _
  // Predicated region
  $region6: #{_lambda_.1} parent=0 // pred_check
    _
  $region7: #{_lambda_.1} parent=0 // pred_check_branch
    %15 = sbr.rel (0) target = $region9
  $region8: #{_lambda_.1} parent=0 // pred_region
    _
  $region9: #{_lambda_.1} parent=0 // pred_fallthru
    _
  // Predicated region
  $region10: #{_lambda_.1} parent=0 // pred_check
    _
  $region11: #{_lambda_.1} parent=0 // pred_check_branch
    %17 = sbr.rel (0) target = $region13
  $region12: #{_lambda_.1} parent=0 // pred_region
    _
  $region13: #{_lambda_.1} parent=0 // pred_fallthru
    _
  // Predicated region
  $region14: #{_lambda_.1} parent=0 // pred_check
    _
  $region15: #{_lambda_.1} parent=0 // pred_check_branch
    %19 = sbr.rel (0) target = $region17
  $region16: #{_lambda_.1} parent=0 // pred_region
    _
  $region17: #{_lambda_.1} parent=0 // pred_fallthru
    _
  // Predicated region
  $region18: #{_lambda_.1} parent=0 // pred_check
    _
  $region19: #{_lambda_.1} parent=0 // pred_check_branch
    %21 = sbr.rel (0) target = $region21
  $region20: #{_lambda_.1} parent=0 // pred_region
    _
  $region21: #{_lambda_.1} parent=0 // pred_fallthru
    _
  // Predicated region
  $region22: #{_lambda_.1} parent=0 // pred_check
    _
  $region23: #{_lambda_.1} parent=0 // pred_check_branch
    %23 = sbr.rel (0) target = $region25
  $region24: #{_lambda_.1} parent=0 // pred_region
    _
  $region25: #{_lambda_.1} parent=0 // pred_fallthru
    _
  // Predicated region
  $region26: #{_lambda_.1} parent=0 // pred_check
    _
  $region27: #{_lambda_.1} parent=0 // pred_check_branch
    %25 = sbr.rel (0) target = $region29
  $region28: #{_lambda_.1} parent=0 // pred_region
    _
  $region29: #{_lambda_.1} parent=0 // pred_fallthru
    _
  %v26 = vld [vmem:[%s0] sm:$0xff]
  %v27 = vld [vmem:[%s0 + $0x8] sm:$0xff]
  %v28 = vld [vmem:[%s0 + $0x10] sm:$0xff]
  %v29 = vld [vmem:[%s0 + $0x18] sm:$0xff]
  %v30 = vld [vmem:[%s0 + $0x20] sm:$0xff]
  %v31 = vld [vmem:[%s0 + $0x28] sm:$0xff]
  %v32 = vld [vmem:[%s0 + $0x30] sm:$0xff]
  %v33 = vld [vmem:[%s0 + $0x38] sm:$0xff]
  %v34 = vld [vmem:[%s0 + $0x40] sm:$0xff]
  %v35 = vld [vmem:[%s0 + $0x48] sm:$0xff]
  %v36 = vld [vmem:[%s0 + $0x50] sm:$0xff]
  %v37 = vld [vmem:[%s0 + $0x58] sm:$0xff]
  %v38 = vld [vmem:[%s0 + $0x60] sm:$0xff]
  %v39 = vld [vmem:[%s0 + $0x68] sm:$0xff]
  %v40 = vld [vmem:[%s0 + $0x70] sm:$0xff]
  %v41 = vld [vmem:[%s0 + $0x78] sm:$0xff]
  %v42 = vld [vmem:[%s1] sm:$0xff]
  %v43 = vld [vmem:[%s1 + $0x8] sm:$0xff]
  %v44 = vld [vmem:[%s1 + $0x10] sm:$0xff]
  %v45 = vld [vmem:[%s1 + $0x18] sm:$0xff]
  %v46 = vld [vmem:[%s1 + $0x20] sm:$0xf]
  %v47 = vld [vmem:[%s2] sm:$0x1]
  %v48 = vlaneseq
  %v49 = vshrl.u32 %v48, 7
  %v50 = vsub.s32 0, %v49
  %v51 = vrot.slane %v47, %v50
  %vm52 = vcmask 293888
  %v54 = vsel %vm52, %v26, 0
  %v57 = vsel %vm52, %v27, 0
  %v60 = vsel %vm52, %v28, 0
  %v63 = vsel %vm52, %v29, 0
  %v66 = vsel %vm52, %v30, 0
  %v69 = vsel %vm52, %v31, 0
  %v72 = vsel %vm52, %v32, 0
  %v75 = vsel %vm52, %v33, 0
  %v78 = vsel %vm52, %v34, 0
  %v81 = vsel %vm52, %v35, 0
  %v84 = vsel %vm52, %v36, 0
  %v87 = vsel %vm52, %v37, 0
  %v90 = vsel %vm52, %v38, 0
  %v93 = vsel %vm52, %v39, 0
  %v96 = vsel %vm52, %v40, 0
  %v99 = vsel %vm52, %v41, 0
  %vm101 = vcmask 1043456
  %v103 = vsel %vm101, %v46, 0
  %105 = vmatprep.subr.mxu0 0.0
  %106 = vmatpush1.msra.mxu0 %v42
  %107 = vmatprep.subr.mxu0 0.0
  %108 = vmatpush1.msra.mxu0 %v43
  %109 = vmatprep.subr.mxu0 0.0
  %110 = vmatpush1.msra.mxu0 %v44
  %111 = vmatprep.subr.mxu0 0.0
  %112 = vmatpush1.msra.mxu0 %v45
  %113 = vmatprep.subr.mxu0 0.0
  %114 = vmatpush1.msra.mxu0 %v103
  %115 = vmatprep.subr.mxu0 0.0
  %116 = vmatpush1.msra.mxu0 0.0
  %117 = vmatprep.subr.mxu0 0.0
  %118 = vmatpush1.msra.mxu0 0.0
  %119 = vmatprep.subr.mxu0 0.0
  %120 = vmatpush1.msra.mxu0 0.0
  %121 = vmatprep.subr.mxu0 0.0
  %122 = vmatpush1.msra.mxu0 0.0
  %123 = vmatprep.subr.mxu0 0.0
  %124 = vmatpush1.msra.mxu0 0.0
  %125 = vmatprep.subr.mxu0 0.0
  %126 = vmatpush1.msra.mxu0 0.0
  %127 = vmatprep.subr.mxu0 0.0
  %128 = vmatpush1.msra.mxu0 0.0
  %129 = vmatprep.subr.mxu0 0.0
  %130 = vmatpush1.msra.mxu0 0.0
  %131 = vmatprep.subr.mxu0 0.0
  %132 = vmatpush1.msra.mxu0 0.0
  %133 = vmatprep.subr.mxu0 0.0
  %134 = vmatpush1.msra.mxu0 0.0
  %135 = vmatprep.subr.mxu0 0.0
  %136 = vmatpush1.msra.mxu0 0.0
  %137 = vmatprep.subr.mxu0 0.0
  %138 = vmatpush1.msra.mxu0 0.0
  %139 = vmatprep.subr.mxu0 0.0
  %140 = vmatpush1.msra.mxu0 0.0
  %141 = vmatprep.subr.mxu0 0.0
  %142 = vmatpush1.msra.mxu0 0.0
  %143 = vmatprep.subr.mxu0 0.0
  %144 = vmatpush1.msra.mxu0 0.0
  %145 = vmatprep.subr.mxu0 0.0
  %146 = vmatpush1.msra.mxu0 0.0
  %147 = vmatprep.subr.mxu0 0.0
  %148 = vmatpush1.msra.mxu0 0.0
  %149 = vmatprep.subr.mxu0 0.0
  %150 = vmatpush1.msra.mxu0 0.0
  %151 = vmatprep.subr.mxu0 0.0
  %152 = vmatpush1.msra.mxu0 0.0
  %153 = vmatprep.subr.mxu0 0.0
  %154 = vmatpush1.msra.mxu0 0.0
  %155 = vmatprep.subr.mxu0 0.0
  %156 = vmatpush1.msra.mxu0 0.0
  %157 = vmatprep.subr.mxu0 0.0
  %158 = vmatpush1.msra.mxu0 0.0
  %159 = vmatprep.subr.mxu0 0.0
  %160 = vmatpush1.msra.mxu0 0.0
  %161 = vmatprep.subr.mxu0 0.0
  %162 = vmatpush1.msra.mxu0 0.0
  %163 = vmatprep.subr.mxu0 0.0
  %164 = vmatpush1.msra.mxu0 0.0
  %165 = vmatprep.subr.mxu0 0.0
  %166 = vmatpush1.msra.mxu0 0.0
  %167 = vmatprep.subr.mxu0 0.0
  %168 = vmatpush1.msra.mxu0 0.0
  %169 = vmatprep.mubr.f32.mxu0 0.0
  %170 = vmatmul.mubr.f32.gmra.mrb[0].mxu0 %v54
  %v171 = vpop.f32.mrb[0].mxu0
  %v172 = vadd.f32 %v51, %v171
  %v173 = vpop.f32.mrb[0].mxu0
  %174 = vmatprep.mubr.f32.mxu0 0.0
  %175 = vmatmul.mubr.f32.gmra.mrb[0].mxu0 %v57
  %v176 = vpop.f32.mrb[0].mxu0
  %v177 = vadd.f32 %v51, %v176
  %v178 = vpop.f32.mrb[0].mxu0
  %179 = vmatprep.mubr.f32.mxu0 0.0
  %180 = vmatmul.mubr.f32.gmra.mrb[0].mxu0 %v60
  %v181 = vpop.f32.mrb[0].mxu0
  %v182 = vadd.f32 %v51, %v181
  %v183 = vpop.f32.mrb[0].mxu0
  %184 = vmatprep.mubr.f32.mxu0 0.0
  %185 = vmatmul.mubr.f32.gmra.mrb[0].mxu0 %v63
  %v186 = vpop.f32.mrb[0].mxu0
  %v187 = vadd.f32 %v51, %v186
  %v188 = vpop.f32.mrb[0].mxu0
  %189 = vmatprep.mubr.f32.mxu0 0.0
  %190 = vmatmul.mubr.f32.gmra.mrb[0].mxu0 %v66
  %v191 = vpop.f32.mrb[0].mxu0
  %v192 = vadd.f32 %v51, %v191
  %v193 = vpop.f32.mrb[0].mxu0
  %194 = vmatprep.mubr.f32.mxu0 0.0
  %195 = vmatmul.mubr.f32.gmra.mrb[0].mxu0 %v69
  %v196 = vpop.f32.mrb[0].mxu0
  %v197 = vadd.f32 %v51, %v196
  %v198 = vpop.f32.mrb[0].mxu0
  %199 = vmatprep.mubr.f32.mxu0 0.0
  %200 = vmatmul.mubr.f32.gmra.mrb[0].mxu0 %v72
  %v201 = vpop.f32.mrb[0].mxu0
  %v202 = vadd.f32 %v51, %v201
  %v203 = vpop.f32.mrb[0].mxu0
  %204 = vmatprep.mubr.f32.mxu0 0.0
  %205 = vmatmul.mubr.f32.gmra.mrb[0].mxu0 %v75
  %v206 = vpop.f32.mrb[0].mxu0
  %v207 = vadd.f32 %v51, %v206
  %v208 = vpop.f32.mrb[0].mxu0
  %209 = vmatprep.mubr.f32.mxu0 0.0
  %210 = vmatmul.mubr.f32.gmra.mrb[0].mxu0 %v78
  %v211 = vpop.f32.mrb[0].mxu0
  %v212 = vadd.f32 %v51, %v211
  %v213 = vpop.f32.mrb[0].mxu0
  %214 = vmatprep.mubr.f32.mxu0 0.0
  %215 = vmatmul.mubr.f32.gmra.mrb[0].mxu0 %v81
  %v216 = vpop.f32.mrb[0].mxu0
  %v217 = vadd.f32 %v51, %v216
  %v218 = vpop.f32.mrb[0].mxu0
  %219 = vmatprep.mubr.f32.mxu0 0.0
  %220 = vmatmul.mubr.f32.gmra.mrb[0].mxu0 %v84
  %v221 = vpop.f32.mrb[0].mxu0
  %v222 = vadd.f32 %v51, %v221
  %v223 = vpop.f32.mrb[0].mxu0
  %224 = vmatprep.mubr.f32.mxu0 0.0
  %225 = vmatmul.mubr.f32.gmra.mrb[0].mxu0 %v87
  %v226 = vpop.f32.mrb[0].mxu0
  %v227 = vadd.f32 %v51, %v226
  %v228 = vpop.f32.mrb[0].mxu0
  %229 = vmatprep.mubr.f32.mxu0 0.0
  %230 = vmatmul.mubr.f32.gmra.mrb[0].mxu0 %v90
  %v231 = vpop.f32.mrb[0].mxu0
  %v232 = vadd.f32 %v51, %v231
  %v233 = vpop.f32.mrb[0].mxu0
  %234 = vmatprep.mubr.f32.mxu0 0.0
  %235 = vmatmul.mubr.f32.gmra.mrb[0].mxu0 %v93
  %v236 = vpop.f32.mrb[0].mxu0
  %v237 = vadd.f32 %v51, %v236
  %v238 = vpop.f32.mrb[0].mxu0
  %239 = vmatprep.mubr.f32.mxu0 0.0
  %240 = vmatmul.mubr.f32.gmra.mrb[0].mxu0 %v96
  %v241 = vpop.f32.mrb[0].mxu0
  %v242 = vadd.f32 %v51, %v241
  %v243 = vpop.f32.mrb[0].mxu0
  %244 = vmatprep.mubr.f32.mxu0 0.0
  %245 = vmatmul.mubr.f32.gmra.mrb[0].mxu0 %v99
  %v246 = vpop.f32.mrb[0].mxu0
  %v247 = vadd.f32 %v51, %v246
  %v248 = vpop.f32.mrb[0].mxu0
  %249 = vdwg.mxu0
  %v250 = vmul.f32 %v172, 0.2
  %v251 = vmul.f32 %v177, 0.2
  %v252 = vmul.f32 %v182, 0.2
  %v253 = vmul.f32 %v187, 0.2
  %v254 = vmul.f32 %v192, 0.2
  %v255 = vmul.f32 %v197, 0.2
  %v256 = vmul.f32 %v202, 0.2
  %v257 = vmul.f32 %v207, 0.2
  %v258 = vmul.f32 %v212, 0.2
  %v259 = vmul.f32 %v217, 0.2
  %v260 = vmul.f32 %v222, 0.2
  %v261 = vmul.f32 %v227, 0.2
  %v262 = vmul.f32 %v232, 0.2
  %v263 = vmul.f32 %v237, 0.2
  %v264 = vmul.f32 %v242, 0.2
  %v265 = vmul.f32 %v247, 0.2
  %v266 = vmax.f32 %v172, %v250
  %v267 = vmax.f32 %v177, %v251
  %v268 = vmax.f32 %v182, %v252
  %v269 = vmax.f32 %v187, %v253
  %v270 = vmax.f32 %v192, %v254
  %v271 = vmax.f32 %v197, %v255
  %v272 = vmax.f32 %v202, %v256
  %v273 = vmax.f32 %v207, %v257
  %v274 = vmax.f32 %v212, %v258
  %v275 = vmax.f32 %v217, %v259
  %v276 = vmax.f32 %v222, %v260
  %v277 = vmax.f32 %v227, %v261
  %v278 = vmax.f32 %v232, %v262
  %v279 = vmax.f32 %v237, %v263
  %v280 = vmax.f32 %v242, %v264
  %v281 = vmax.f32 %v247, %v265
  %v282 = vld [vmem:[%s3] sm:$0xff]
  %v283 = vld [vmem:[%s3 + $0x8] sm:$0xff]
  %v284 = vld [vmem:[%s3 + $0x10] sm:$0xff]
  %v285 = vld [vmem:[%s3 + $0x18] sm:$0xff]
  %v286 = vld [vmem:[%s3 + $0x20] sm:$0xff]
  %v287 = vld [vmem:[%s3 + $0x28] sm:$0xff]
  %v288 = vld [vmem:[%s3 + $0x30] sm:$0xff]
  %v289 = vld [vmem:[%s3 + $0x38] sm:$0xff]
  %v290 = vld [vmem:[%s3 + $0x40] sm:$0xff]
  %v291 = vld [vmem:[%s3 + $0x48] sm:$0xff]
  %v292 = vld [vmem:[%s3 + $0x50] sm:$0xff]
  %v293 = vld [vmem:[%s3 + $0x58] sm:$0xff]
  %v294 = vld [vmem:[%s3 + $0x60] sm:$0xff]
  %v295 = vld [vmem:[%s3 + $0x68] sm:$0xff]
  %v296 = vld [vmem:[%s3 + $0x70] sm:$0xff]
  %v297 = vld [vmem:[%s3 + $0x78] sm:$0xff]
  %v298 = vld [vmem:[%s3 + $0x80] sm:$0xff]
  %v299 = vld [vmem:[%s3 + $0x88] sm:$0xff]
  %v300 = vld [vmem:[%s3 + $0x90] sm:$0xff]
  %v301 = vld [vmem:[%s3 + $0x98] sm:$0xff]
  %v302 = vld [vmem:[%s3 + $0xa0] sm:$0xff]
  %v303 = vld [vmem:[%s3 + $0xa8] sm:$0xff]
  %v304 = vld [vmem:[%s3 + $0xb0] sm:$0xff]
  %v305 = vld [vmem:[%s3 + $0xb8] sm:$0xff]
  %v306 = vld [vmem:[%s3 + $0xc0] sm:$0xff]
  %v307 = vld [vmem:[%s3 + $0xc8] sm:$0xff]
  %v308 = vld [vmem:[%s3 + $0xd0] sm:$0xff]
  %v309 = vld [vmem:[%s3 + $0xd8] sm:$0xff]
  %v310 = vld [vmem:[%s3 + $0xe0] sm:$0xff]
  %v311 = vld [vmem:[%s3 + $0xe8] sm:$0xff]
  %v312 = vld [vmem:[%s3 + $0xf0] sm:$0xff]
  %v313 = vld [vmem:[%s3 + $0xf8] sm:$0xff]
  %v314 = vld [vmem:[%s3 + $0x100] sm:$0xff]
  %v315 = vld [vmem:[%s3 + $0x108] sm:$0xff]
  %v316 = vld [vmem:[%s3 + $0x110] sm:$0xff]
  %v317 = vld [vmem:[%s3 + $0x118] sm:$0xff]
  %318 = vmatprep.subr.mxu0 0.0
  %319 = vmatpush1.msra.mxu0 %v266
  %320 = vmatprep.subr.mxu0 0.0
  %321 = vmatpush1.msra.mxu0 %v267
  %322 = vmatprep.subr.mxu0 0.0
  %323 = vmatpush1.msra.mxu0 %v268
  %324 = vmatprep.subr.mxu0 0.0
  %325 = vmatpush1.msra.mxu0 %v269
  %326 = vmatprep.subr.mxu0 0.0
  %327 = vmatpush1.msra.mxu0 %v270
  %328 = vmatprep.subr.mxu0 0.0
  %329 = vmatpush1.msra.mxu0 %v271
  %330 = vmatprep.subr.mxu0 0.0
  %331 = vmatpush1.msra.mxu0 %v272
  %332 = vmatprep.subr.mxu0 0.0
  %333 = vmatpush1.msra.mxu0 %v273
  %334 = vmatprep.subr.mxu0 0.0
  %335 = vmatpush1.msra.mxu0 %v274
  %336 = vmatprep.subr.mxu0 0.0
  %337 = vmatpush1.msra.mxu0 %v275
  %338 = vmatprep.subr.mxu0 0.0
  %339 = vmatpush1.msra.mxu0 %v276
  %340 = vmatprep.subr.mxu0 0.0
  %341 = vmatpush1.msra.mxu0 %v277
  %342 = vmatprep.subr.mxu0 0.0
  %343 = vmatpush1.msra.mxu0 %v278
  %344 = vmatprep.subr.mxu0 0.0
  %345 = vmatpush1.msra.mxu0 %v279
  %346 = vmatprep.subr.mxu0 0.0
  %347 = vmatpush1.msra.mxu0 %v280
  %348 = vmatprep.subr.mxu0 0.0
  %349 = vmatpush1.msra.mxu0 %v281
  %350 = vmatprep.subr.mxu0 0.0
  %351 = vmatpush1.msra.mxu0 0.0
  %352 = vmatprep.subr.mxu0 0.0
  %353 = vmatpush1.msra.mxu0 0.0
  %354 = vmatprep.subr.mxu0 0.0
  %355 = vmatpush1.msra.mxu0 0.0
  %356 = vmatprep.subr.mxu0 0.0
  %357 = vmatpush1.msra.mxu0 0.0
  %358 = vmatprep.subr.mxu0 0.0
  %359 = vmatpush1.msra.mxu0 0.0
  %360 = vmatprep.subr.mxu0 0.0
  %361 = vmatpush1.msra.mxu0 0.0
  %362 = vmatprep.subr.mxu0 0.0
  %363 = vmatpush1.msra.mxu0 0.0
  %364 = vmatprep.subr.mxu0 0.0
  %365 = vmatpush1.msra.mxu0 0.0
  %366 = vmatprep.subr.mxu0 0.0
  %367 = vmatpush1.msra.mxu0 0.0
  %368 = vmatprep.subr.mxu0 0.0
  %369 = vmatpush1.msra.mxu0 0.0
  %370 = vmatprep.subr.mxu0 0.0
  %371 = vmatpush1.msra.mxu0 0.0
  %372 = vmatprep.subr.mxu0 0.0
  %373 = vmatpush1.msra.mxu0 0.0
  %374 = vmatprep.subr.mxu0 0.0
  %375 = vmatpush1.msra.mxu0 0.0
  %376 = vmatprep.subr.mxu0 0.0
  %377 = vmatpush1.msra.mxu0 0.0
  %378 = vmatprep.subr.mxu0 0.0
  %379 = vmatpush1.msra.mxu0 0.0
  %380 = vmatprep.subr.mxu0 0.0
  %381 = vmatpush1.msra.mxu0 0.0
  %382 = vmatprep.mubr.f32.mxu0 0.0
  %383 = vmatmul.mubr.f32.gmra.mrb[0].mxu0 %v282
  %v384 = vpop.f32.mrb[0].mxu0
  %v385 = vadd.f32 0.0, %v384
  %v386 = vpop.f32.mrb[0].mxu0
  %387 = vmatprep.mubr.f32.mxu0 0.0
  %388 = vmatmul.mubr.f32.gmra.mrb[0].mxu0 %v283
  %v389 = vpop.f32.mrb[0].mxu0
  %v390 = vadd.f32 0.0, %v389
  %v391 = vpop.f32.mrb[0].mxu0
  %392 = vmatprep.mubr.f32.mxu0 0.0
  %393 = vmatmul.mubr.f32.gmra.mrb[0].mxu0 %v284
  %v394 = vpop.f32.mrb[0].mxu0
  %v395 = vadd.f32 0.0, %v394
  %v396 = vpop.f32.mrb[0].mxu0
  %397 = vmatprep.mubr.f32.mxu0 0.0
  %398 = vmatmul.mubr.f32.gmra.mrb[0].mxu0 %v285
  %v399 = vpop.f32.mrb[0].mxu0
  %v400 = vadd.f32 0.0, %v399
  %v401 = vpop.f32.mrb[0].mxu0
  %402 = vmatprep.mubr.f32.mxu0 0.0
  %403 = vmatmul.mubr.f32.gmra.mrb[0].mxu0 %v286
  %v404 = vpop.f32.mrb[0].mxu0
  %v405 = vadd.f32 0.0, %v404
  %v406 = vpop.f32.mrb[0].mxu0
  %407 = vmatprep.mubr.f32.mxu0 0.0
  %408 = vmatmul.mubr.f32.gmra.mrb[0].mxu0 %v287
  %v409 = vpop.f32.mrb[0].mxu0
  %v410 = vadd.f32 0.0, %v409
  %v411 = vpop.f32.mrb[0].mxu0
  %412 = vmatprep.mubr.f32.mxu0 0.0
  %413 = vmatmul.mubr.f32.gmra.mrb[0].mxu0 %v288
  %v414 = vpop.f32.mrb[0].mxu0
  %v415 = vadd.f32 0.0, %v414
  %v416 = vpop.f32.mrb[0].mxu0
  %417 = vmatprep.mubr.f32.mxu0 0.0
  %418 = vmatmul.mubr.f32.gmra.mrb[0].mxu0 %v289
  %v419 = vpop.f32.mrb[0].mxu0
  %v420 = vadd.f32 0.0, %v419
  %v421 = vpop.f32.mrb[0].mxu0
  %422 = vmatprep.mubr.f32.mxu0 0.0
  %423 = vmatmul.mubr.f32.gmra.mrb[0].mxu0 %v290
  %v424 = vpop.f32.mrb[0].mxu0
  %v425 = vadd.f32 0.0, %v424
  %v426 = vpop.f32.mrb[0].mxu0
  %427 = vmatprep.mubr.f32.mxu0 0.0
  %428 = vmatmul.mubr.f32.gmra.mrb[0].mxu0 %v291
  %v429 = vpop.f32.mrb[0].mxu0
  %v430 = vadd.f32 0.0, %v429
  %v431 = vpop.f32.mrb[0].mxu0
  %432 = vmatprep.mubr.f32.mxu0 0.0
  %433 = vmatmul.mubr.f32.gmra.mrb[0].mxu0 %v292
  %v434 = vpop.f32.mrb[0].mxu0
  %v435 = vadd.f32 0.0, %v434
  %v436 = vpop.f32.mrb[0].mxu0
  %437 = vmatprep.mubr.f32.mxu0 0.0
  %438 = vmatmul.mubr.f32.gmra.mrb[0].mxu0 %v293
  %v439 = vpop.f32.mrb[0].mxu0
  %v440 = vadd.f32 0.0, %v439
  %v441 = vpop.f32.mrb[0].mxu0
  %442 = vmatprep.mubr.f32.mxu0 0.0
  %443 = vmatmul.mubr.f32.gmra.mrb[0].mxu0 %v294
  %v444 = vpop.f32.mrb[0].mxu0
  %v445 = vadd.f32 0.0, %v444
  %v446 = vpop.f32.mrb[0].mxu0
  %447 = vmatprep.mubr.f32.mxu0 0.0
  %448 = vmatmul.mubr.f32.gmra.mrb[0].mxu0 %v295
  %v449 = vpop.f32.mrb[0].mxu0
  %v450 = vadd.f32 0.0, %v449
  %v451 = vpop.f32.mrb[0].mxu0
  %452 = vmatprep.mubr.f32.mxu0 0.0
  %453 = vmatmul.mubr.f32.gmra.mrb[0].mxu0 %v296
  %v454 = vpop.f32.mrb[0].mxu0
  %v455 = vadd.f32 0.0, %v454
  %v456 = vpop.f32.mrb[0].mxu0
  %457 = vmatprep.mubr.f32.mxu0 0.0
  %458 = vmatmul.mubr.f32.gmra.mrb[0].mxu0 %v297
  %v459 = vpop.f32.mrb[0].mxu0
  %v460 = vadd.f32 0.0, %v459
  %v461 = vpop.f32.mrb[0].mxu0
  %462 = vmatprep.mubr.f32.mxu0 0.0
  %463 = vmatmul.mubr.f32.gmra.mrb[0].mxu0 %v298
  %v464 = vpop.f32.mrb[0].mxu0
  %v465 = vadd.f32 0.0, %v464
  %v466 = vpop.f32.mrb[0].mxu0
  %467 = vmatprep.mubr.f32.mxu0 0.0
  %468 = vmatmul.mubr.f32.gmra.mrb[0].mxu0 %v299
  %v469 = vpop.f32.mrb[0].mxu0
  %v470 = vadd.f32 0.0, %v469
  %v471 = vpop.f32.mrb[0].mxu0
  %472 = vmatprep.mubr.f32.mxu0 0.0
  %473 = vmatmul.mubr.f32.gmra.mrb[0].mxu0 %v300
  %v474 = vpop.f32.mrb[0].mxu0
  %v475 = vadd.f32 0.0, %v474
  %v476 = vpop.f32.mrb[0].mxu0
  %477 = vmatprep.mubr.f32.mxu0 0.0
  %478 = vmatmul.mubr.f32.gmra.mrb[0].mxu0 %v301
  %v479 = vpop.f32.mrb[0].mxu0
  %v480 = vadd.f32 0.0, %v479
  %v481 = vpop.f32.mrb[0].mxu0
  %482 = vmatprep.mubr.f32.mxu0 0.0
  %483 = vmatmul.mubr.f32.gmra.mrb[0].mxu0 %v302
  %v484 = vpop.f32.mrb[0].mxu0
  %v485 = vadd.f32 0.0, %v484
  %v486 = vpop.f32.mrb[0].mxu0
  %487 = vmatprep.mubr.f32.mxu0 0.0
  %488 = vmatmul.mubr.f32.gmra.mrb[0].mxu0 %v303
  %v489 = vpop.f32.mrb[0].mxu0
  %v490 = vadd.f32 0.0, %v489
  %v491 = vpop.f32.mrb[0].mxu0
  %492 = vmatprep.mubr.f32.mxu0 0.0
  %493 = vmatmul.mubr.f32.gmra.mrb[0].mxu0 %v304
  %v494 = vpop.f32.mrb[0].mxu0
  %v495 = vadd.f32 0.0, %v494
  %v496 = vpop.f32.mrb[0].mxu0
  %497 = vmatprep.mubr.f32.mxu0 0.0
  %498 = vmatmul.mubr.f32.gmra.mrb[0].mxu0 %v305
  %v499 = vpop.f32.mrb[0].mxu0
  %v500 = vadd.f32 0.0, %v499
  %v501 = vpop.f32.mrb[0].mxu0
  %502 = vmatprep.mubr.f32.mxu0 0.0
  %503 = vmatmul.mubr.f32.gmra.mrb[0].mxu0 %v306
  %v504 = vpop.f32.mrb[0].mxu0
  %v505 = vadd.f32 0.0, %v504
  %v506 = vpop.f32.mrb[0].mxu0
  %507 = vmatprep.mubr.f32.mxu0 0.0
  %508 = vmatmul.mubr.f32.gmra.mrb[0].mxu0 %v307
  %v509 = vpop.f32.mrb[0].mxu0
  %v510 = vadd.f32 0.0, %v509
  %v511 = vpop.f32.mrb[0].mxu0
  %512 = vmatprep.mubr.f32.mxu0 0.0
  %513 = vmatmul.mubr.f32.gmra.mrb[0].mxu0 %v308
  %v514 = vpop.f32.mrb[0].mxu0
  %v515 = vadd.f32 0.0, %v514
  %v516 = vpop.f32.mrb[0].mxu0
  %517 = vmatprep.mubr.f32.mxu0 0.0
  %518 = vmatmul.mubr.f32.gmra.mrb[0].mxu0 %v309
  %v519 = vpop.f32.mrb[0].mxu0
  %v520 = vadd.f32 0.0, %v519
  %v521 = vpop.f32.mrb[0].mxu0
  %522 = vmatprep.mubr.f32.mxu0 0.0
  %523 = vmatmul.mubr.f32.gmra.mrb[0].mxu0 %v310
  %v524 = vpop.f32.mrb[0].mxu0
  %v525 = vadd.f32 0.0, %v524
  %v526 = vpop.f32.mrb[0].mxu0
  %527 = vmatprep.mubr.f32.mxu0 0.0
  %528 = vmatmul.mubr.f32.gmra.mrb[0].mxu0 %v311
  %v529 = vpop.f32.mrb[0].mxu0
  %v530 = vadd.f32 0.0, %v529
  %v531 = vpop.f32.mrb[0].mxu0
  %532 = vmatprep.mubr.f32.mxu0 0.0
  %533 = vmatmul.mubr.f32.gmra.mrb[0].mxu0 %v312
  %v534 = vpop.f32.mrb[0].mxu0
  %v535 = vadd.f32 0.0, %v534
  %v536 = vpop.f32.mrb[0].mxu0
  %537 = vmatprep.mubr.f32.mxu0 0.0
  %538 = vmatmul.mubr.f32.gmra.mrb[0].mxu0 %v313
  %v539 = vpop.f32.mrb[0].mxu0
  %v540 = vadd.f32 0.0, %v539
  %v541 = vpop.f32.mrb[0].mxu0
  %542 = vmatprep.mubr.f32.mxu0 0.0
  %543 = vmatmul.mubr.f32.gmra.mrb[0].mxu0 %v314
  %v544 = vpop.f32.mrb[0].mxu0
  %v545 = vadd.f32 0.0, %v544
  %v546 = vpop.f32.mrb[0].mxu0
  %547 = vmatprep.mubr.f32.mxu0 0.0
  %548 = vmatmul.mubr.f32.gmra.mrb[0].mxu0 %v315
  %v549 = vpop.f32.mrb[0].mxu0
  %v550 = vadd.f32 0.0, %v549
  %v551 = vpop.f32.mrb[0].mxu0
  %552 = vmatprep.mubr.f32.mxu0 0.0
  %553 = vmatmul.mubr.f32.gmra.mrb[0].mxu0 %v316
  %v554 = vpop.f32.mrb[0].mxu0
  %v555 = vadd.f32 0.0, %v554
  %v556 = vpop.f32.mrb[0].mxu0
  %557 = vmatprep.mubr.f32.mxu0 0.0
  %558 = vmatmul.mubr.f32.gmra.mrb[0].mxu0 %v317
  %v559 = vpop.f32.mrb[0].mxu0
  %v560 = vadd.f32 0.0, %v559
  %v561 = vpop.f32.mrb[0].mxu0
  %562 = vdwg.mxu0
  %vm563 = vcmask 64512
  %564 = vst.msk [vmem:[#allocation3] sm:$0xff] %vm563, %v385
  %565 = vst.msk [vmem:[#allocation3 + $0x8] sm:$0xff] %vm563, %v390
  %566 = vst.msk [vmem:[#allocation3 + $0x10] sm:$0xff] %vm563, %v395
  %567 = vst.msk [vmem:[#allocation3 + $0x18] sm:$0xff] %vm563, %v400
  %572 = vrot.lane.b32.xlu0 %v405, 8
  %v573 = vpop.permute.xlu0 %572
  %574 = vrot.lane.b32.xlu0 %v410, 8
  %v575 = vpop.permute.xlu0 %574
  %576 = vrot.lane.b32.xlu0 %v415, 8
  %v577 = vpop.permute.xlu0 %576
  %578 = vrot.lane.b32.xlu0 %v420, 8
  %v579 = vpop.permute.xlu0 %578
  %vm584 = vcmask 130112
  %585 = vst.msk [vmem:[#allocation3] sm:$0xff] %vm584, %v573
  %586 = vst.msk [vmem:[#allocation3 + $0x8] sm:$0xff] %vm584, %v575
  %587 = vst.msk [vmem:[#allocation3 + $0x10] sm:$0xff] %vm584, %v577
  %588 = vst.msk [vmem:[#allocation3 + $0x18] sm:$0xff] %vm584, %v579
  %593 = vrot.lane.b32.xlu0 %v425, 16
  %v594 = vpop.permute.xlu0 %593
  %595 = vrot.lane.b32.xlu0 %v430, 16
  %v596 = vpop.permute.xlu0 %595
  %597 = vrot.lane.b32.xlu0 %v435, 16
  %v598 = vpop.permute.xlu0 %597
  %599 = vrot.lane.b32.xlu0 %v440, 16
  %v600 = vpop.permute.xlu0 %599
  %vm605 = vcmask 195712
  %606 = vst.msk [vmem:[#allocation3] sm:$0xff] %vm605, %v594
  %607 = vst.msk [vmem:[#allocation3 + $0x8] sm:$0xff] %vm605, %v596
  %608 = vst.msk [vmem:[#allocation3 + $0x10] sm:$0xff] %vm605, %v598
  %609 = vst.msk [vmem:[#allocation3 + $0x18] sm:$0xff] %vm605, %v600
  %614 = vrot.lane.b32.xlu0 %v445, 24
  %v615 = vpop.permute.xlu0 %614
  %616 = vrot.lane.b32.xlu0 %v450, 24
  %v617 = vpop.permute.xlu0 %616
  %618 = vrot.lane.b32.xlu0 %v455, 24
  %v619 = vpop.permute.xlu0 %618
  %620 = vrot.lane.b32.xlu0 %v460, 24
  %v621 = vpop.permute.xlu0 %620
  %vm626 = vcmask 261312
  %627 = vst.msk [vmem:[#allocation3] sm:$0xff] %vm626, %v615
  %628 = vst.msk [vmem:[#allocation3 + $0x8] sm:$0xff] %vm626, %v617
  %629 = vst.msk [vmem:[#allocation3 + $0x10] sm:$0xff] %vm626, %v619
  %630 = vst.msk [vmem:[#allocation3 + $0x18] sm:$0xff] %vm626, %v621
  %635 = vrot.lane.b32.xlu0 %v465, 32
  %v636 = vpop.permute.xlu0 %635
  %637 = vrot.lane.b32.xlu0 %v470, 32
  %v638 = vpop.permute.xlu0 %637
  %639 = vrot.lane.b32.xlu0 %v475, 32
  %v640 = vpop.permute.xlu0 %639
  %641 = vrot.lane.b32.xlu0 %v480, 32
  %v642 = vpop.permute.xlu0 %641
  %vm647 = vcmask 326912
  %648 = vst.msk [vmem:[#allocation3] sm:$0xff] %vm647, %v636
  %649 = vst.msk [vmem:[#allocation3 + $0x8] sm:$0xff] %vm647, %v638
  %650 = vst.msk [vmem:[#allocation3 + $0x10] sm:$0xff] %vm647, %v640
  %651 = vst.msk [vmem:[#allocation3 + $0x18] sm:$0xff] %vm647, %v642
  %656 = vrot.lane.b32.xlu0 %v485, 40
  %v657 = vpop.permute.xlu0 %656
  %658 = vrot.lane.b32.xlu0 %v490, 40
  %v659 = vpop.permute.xlu0 %658
  %660 = vrot.lane.b32.xlu0 %v495, 40
  %v661 = vpop.permute.xlu0 %660
  %662 = vrot.lane.b32.xlu0 %v500, 40
  %v663 = vpop.permute.xlu0 %662
  %vm668 = vcmask 392512
  %669 = vst.msk [vmem:[#allocation3] sm:$0xff] %vm668, %v657
  %670 = vst.msk [vmem:[#allocation3 + $0x8] sm:$0xff] %vm668, %v659
  %671 = vst.msk [vmem:[#allocation3 + $0x10] sm:$0xff] %vm668, %v661
  %672 = vst.msk [vmem:[#allocation3 + $0x18] sm:$0xff] %vm668, %v663
  %677 = vrot.lane.b32.xlu0 %v505, 48
  %v678 = vpop.permute.xlu0 %677
  %679 = vrot.lane.b32.xlu0 %v510, 48
  %v680 = vpop.permute.xlu0 %679
  %681 = vrot.lane.b32.xlu0 %v515, 48
  %v682 = vpop.permute.xlu0 %681
  %683 = vrot.lane.b32.xlu0 %v520, 48
  %v684 = vpop.permute.xlu0 %683
  %vm689 = vcmask 458112
  %690 = vst.msk [vmem:[#allocation3] sm:$0xff] %vm689, %v678
  %691 = vst.msk [vmem:[#allocation3 + $0x8] sm:$0xff] %vm689, %v680
  %692 = vst.msk [vmem:[#allocation3 + $0x10] sm:$0xff] %vm689, %v682
  %693 = vst.msk [vmem:[#allocation3 + $0x18] sm:$0xff] %vm689, %v684
  %698 = vrot.lane.b32.xlu0 %v525, 56
  %v699 = vpop.permute.xlu0 %698
  %700 = vrot.lane.b32.xlu0 %v530, 56
  %v701 = vpop.permute.xlu0 %700
  %702 = vrot.lane.b32.xlu0 %v535, 56
  %v703 = vpop.permute.xlu0 %702
  %704 = vrot.lane.b32.xlu0 %v540, 56
  %v705 = vpop.permute.xlu0 %704
  %vm710 = vcmask 523712
  %711 = vst.msk [vmem:[#allocation3] sm:$0xff] %vm710, %v699
  %712 = vst.msk [vmem:[#allocation3 + $0x8] sm:$0xff] %vm710, %v701
  %713 = vst.msk [vmem:[#allocation3 + $0x10] sm:$0xff] %vm710, %v703
  %714 = vst.msk [vmem:[#allocation3 + $0x18] sm:$0xff] %vm710, %v705
  %719 = vrot.lane.b32.xlu0 %v545, 64
  %v720 = vpop.permute.xlu0 %719
  %721 = vrot.lane.b32.xlu0 %v550, 64
  %v722 = vpop.permute.xlu0 %721
  %723 = vrot.lane.b32.xlu0 %v555, 64
  %v724 = vpop.permute.xlu0 %723
  %725 = vrot.lane.b32.xlu0 %v560, 64
  %v726 = vpop.permute.xlu0 %725
  %vm731 = vcmask 589312
  %732 = vst.msk [vmem:[#allocation3] sm:$0xff] %vm731, %v720
  %733 = vst.msk [vmem:[#allocation3 + $0x8] sm:$0xff] %vm731, %v722
  %734 = vst.msk [vmem:[#allocation3 + $0x10] sm:$0xff] %vm731, %v724
  %735 = vst.msk [vmem:[#allocation3 + $0x18] sm:$0xff] %vm731, %v726
  %v736 = vld [vmem:[#allocation3] sm:$0xff]
  %v737 = vld [vmem:[#allocation3 + $0x8] sm:$0xff]
  %v738 = vld [vmem:[#allocation3 + $0x10] sm:$0xff]
  %v739 = vld [vmem:[#allocation3 + $0x18] sm:$0xff]
  %v740 = vld [vmem:[%s4] sm:$0xff]
  %v741 = vld [vmem:[%s4 + $0x8] sm:$0xff]
  %v742 = vld [vmem:[%s4 + $0x10] sm:$0xff]
  %v743 = vld [vmem:[%s4 + $0x18] sm:$0xff]
  %v744 = vld [vmem:[%s4 + $0x20] sm:$0xff]
  %v745 = vld [vmem:[%s4 + $0x28] sm:$0xff]
  %v746 = vld [vmem:[%s4 + $0x30] sm:$0xff]
  %v747 = vld [vmem:[%s4 + $0x38] sm:$0xff]
  %v748 = vld [vmem:[%s4 + $0x40] sm:$0xff]
  %vm749 = vcmask 588800
  %v751 = vsel %vm749, %v736, 0
  %v754 = vsel %vm749, %v737, 0
  %v757 = vsel %vm749, %v738, 0
  %v760 = vsel %vm749, %v739, 0
  %762 = vmatprep.subr.mxu0 0.0
  %763 = vmatpush1.msra.mxu0 %v740
  %764 = vmatprep.subr.mxu0 0.0
  %765 = vmatpush1.msra.mxu0 %v741
  %766 = vmatprep.subr.mxu0 0.0
  %767 = vmatpush1.msra.mxu0 %v742
  %768 = vmatprep.subr.mxu0 0.0
  %769 = vmatpush1.msra.mxu0 %v743
  %770 = vmatprep.subr.mxu0 0.0
  %771 = vmatpush1.msra.mxu0 %v744
  %772 = vmatprep.subr.mxu0 0.0
  %773 = vmatpush1.msra.mxu0 %v745
  %774 = vmatprep.subr.mxu0 0.0
  %775 = vmatpush1.msra.mxu0 %v746
  %776 = vmatprep.subr.mxu0 0.0
  %777 = vmatpush1.msra.mxu0 %v747
  %778 = vmatprep.subr.mxu0 0.0
  %779 = vmatpush1.msra.mxu0 %v748
  %780 = vmatprep.subr.mxu0 0.0
  %781 = vmatpush1.msra.mxu0 0.0
  %782 = vmatprep.subr.mxu0 0.0
  %783 = vmatpush1.msra.mxu0 0.0
  %784 = vmatprep.subr.mxu0 0.0
  %785 = vmatpush1.msra.mxu0 0.0
  %786 = vmatprep.subr.mxu0 0.0
  %787 = vmatpush1.msra.mxu0 0.0
  %788 = vmatprep.subr.mxu0 0.0
  %789 = vmatpush1.msra.mxu0 0.0
  %790 = vmatprep.subr.mxu0 0.0
  %791 = vmatpush1.msra.mxu0 0.0
  %792 = vmatprep.subr.mxu0 0.0
  %793 = vmatpush1.msra.mxu0 0.0
  %794 = vmatprep.subr.mxu0 0.0
  %795 = vmatpush1.msra.mxu0 0.0
  %796 = vmatprep.subr.mxu0 0.0
  %797 = vmatpush1.msra.mxu0 0.0
  %798 = vmatprep.subr.mxu0 0.0
  %799 = vmatpush1.msra.mxu0 0.0
  %800 = vmatprep.subr.mxu0 0.0
  %801 = vmatpush1.msra.mxu0 0.0
  %802 = vmatprep.subr.mxu0 0.0
  %803 = vmatpush1.msra.mxu0 0.0
  %804 = vmatprep.subr.mxu0 0.0
  %805 = vmatpush1.msra.mxu0 0.0
  %806 = vmatprep.subr.mxu0 0.0
  %807 = vmatpush1.msra.mxu0 0.0
  %808 = vmatprep.subr.mxu0 0.0
  %809 = vmatpush1.msra.mxu0 0.0
  %810 = vmatprep.subr.mxu0 0.0
  %811 = vmatpush1.msra.mxu0 0.0
  %812 = vmatprep.subr.mxu0 0.0
  %813 = vmatpush1.msra.mxu0 0.0
  %814 = vmatprep.subr.mxu0 0.0
  %815 = vmatpush1.msra.mxu0 0.0
  %816 = vmatprep.subr.mxu0 0.0
  %817 = vmatpush1.msra.mxu0 0.0
  %818 = vmatprep.subr.mxu0 0.0
  %819 = vmatpush1.msra.mxu0 0.0
  %820 = vmatprep.subr.mxu0 0.0
  %821 = vmatpush1.msra.mxu0 0.0
  %822 = vmatprep.subr.mxu0 0.0
  %823 = vmatpush1.msra.mxu0 0.0
  %824 = vmatprep.subr.mxu0 0.0
  %825 = vmatpush1.msra.mxu0 0.0
  %826 = vmatprep.mubr.f32.mxu0 0.0
  %827 = vmatmul.mubr.f32.gmra.mrb[0].mxu0 %v751
  %v828 = vpop.f32.mrb[0].mxu0
  %v829 = vadd.f32 0.0, %v828
  %v830 = vpop.f32.mrb[0].mxu0
  %831 = vmatprep.mubr.f32.mxu0 0.0
  %832 = vmatmul.mubr.f32.gmra.mrb[0].mxu0 %v754
  %v833 = vpop.f32.mrb[0].mxu0
  %v834 = vadd.f32 0.0, %v833
  %v835 = vpop.f32.mrb[0].mxu0
  %836 = vmatprep.mubr.f32.mxu0 0.0
  %837 = vmatmul.mubr.f32.gmra.mrb[0].mxu0 %v757
  %v838 = vpop.f32.mrb[0].mxu0
  %v839 = vadd.f32 0.0, %v838
  %v840 = vpop.f32.mrb[0].mxu0
  %841 = vmatprep.mubr.f32.mxu0 0.0
  %842 = vmatmul.mubr.f32.gmra.mrb[0].mxu0 %v760
  %v843 = vpop.f32.mrb[0].mxu0
  %v844 = vadd.f32 0.0, %v843
  %v845 = vpop.f32.mrb[0].mxu0
  %846 = vdwg.mxu0
  %vm847 = vcmask 130048
  %848 = vst.msk [vmem:[#allocation2] sm:$0xff] %vm847, %v829
  %849 = vst.msk [vmem:[#allocation2 + $0x8] sm:$0xff] %vm847, %v834
  %850 = vst.msk [vmem:[#allocation2 + $0x10] sm:$0xff] %vm847, %v839
  %851 = vst.msk [vmem:[#allocation2 + $0x18] sm:$0xff] %vm847, %v844
  %p852 = scmp.eq.s32.totalorder 0, 0
  // Predicated region
  $region30: #{_lambda_.1} parent=0 // pred_check
    %p853 = pneg %p852
  $region31: #{_lambda_.1} parent=0 // pred_check_branch
    %855 = sbr.rel (%p853) target = $region33
  $region32: #{_lambda_.1} parent=0 // pred_region
    %v856 = vld [vmem:[#allocation2] sm:$0xff]
    %v857 = vld [vmem:[#allocation2 + $0x8] sm:$0xff]
    %v858 = vld [vmem:[#allocation2 + $0x10] sm:$0xff]
    %v859 = vld [vmem:[#allocation2 + $0x18] sm:$0xff]
    %v860 = vsel %vm847, %v856, 0.0
    %v861 = vsel %vm847, %v857, 0.0
    %v862 = vadd.f32 %v860, %v861
    %v863 = vsel %vm847, %v858, 0.0
    %v864 = vadd.f32 %v862, %v863
    %v865 = vsel %vm847, %v859, 0.0
    %v866 = vadd.f32 %v864, %v865
    %v867 = vrot.slane %v866, 4
    %v868 = vadd.f32 %v866, %v867
    %v869 = vrot.slane %v868, 2
    %v870 = vadd.f32 %v868, %v869
    %v871 = vrot.slane %v870, 1
    %v872 = vadd.f32 %v870, %v871
    %v873 = vrcp.pop 32.0
    %v874 = vmul.f32 %v872, %v873
    %v875 = vsub.f32 %v856, %v874
    %v876 = vsub.f32 %v857, %v874
    %v877 = vsub.f32 %v858, %v874
    %v878 = vsub.f32 %v859, %v874
    %v879 = vmul.f32 %v875, %v875
    %v880 = vmul.f32 %v876, %v876
    %v881 = vmul.f32 %v877, %v877
    %v882 = vmul.f32 %v878, %v878
    %v883 = vsel %vm847, %v879, 0.0
    %v884 = vsel %vm847, %v880, 0.0
    %v885 = vadd.f32 %v883, %v884
    %v886 = vsel %vm847, %v881, 0.0
    %v887 = vadd.f32 %v885, %v886
    %v888 = vsel %vm847, %v882, 0.0
    %v889 = vadd.f32 %v887, %v888
    %v890 = vrot.slane %v889, 4
    %v891 = vadd.f32 %v889, %v890
    %v892 = vrot.slane %v891, 2
    %v893 = vadd.f32 %v891, %v892
    %v894 = vrot.slane %v893, 1
    %v895 = vadd.f32 %v893, %v894
    %v896 = vmul.f32 %v895, %v873
    %v897 = vadd.f32 %v896, 1e-05
    %v898 = vrsqrt.pop %v897
    %v899 = vmul.f32 %v875, %v898
    %v900 = vmul.f32 %v876, %v898
    %v901 = vmul.f32 %v877, %v898
    %v902 = vmul.f32 %v878, %v898
    %v903 = vld [vmem:[%s2 + $0x1] sm:$0x1]
    %v904 = vlaneseq
    %v905 = vshrl.u32 %v904, 7
    %v906 = vsub.s32 0, %v905
    %v907 = vrot.slane %v903, %v906
    %v908 = vmul.f32 %v899, %v907
    %v909 = vmul.f32 %v900, %v907
    %v910 = vmul.f32 %v901, %v907
    %v911 = vmul.f32 %v902, %v907
    %v912 = vld [vmem:[%s2 + $0x2] sm:$0x1]
    %v913 = vlaneseq
    %v914 = vshrl.u32 %v913, 7
    %v915 = vsub.s32 0, %v914
    %v916 = vrot.slane %v912, %v915
    %v917 = vadd.f32 %v908, %v916
    %v918 = vadd.f32 %v909, %v916
    %v919 = vadd.f32 %v910, %v916
    %v920 = vadd.f32 %v911, %v916
    %v921 = vmul.f32 %v917, 0.2
    %v922 = vmul.f32 %v918, 0.2
    %v923 = vmul.f32 %v919, 0.2
    %v924 = vmul.f32 %v920, 0.2
    %v925 = vmax.f32 %v917, %v921
    %v926 = vmax.f32 %v918, %v922
    %v927 = vmax.f32 %v919, %v923
    %v928 = vmax.f32 %v920, %v924
    %v929 = vld [vmem:[%s2 + $0x3] sm:$0x1]
    %v930 = vld [vmem:[%s5] sm:$0xff]
    %v931 = vld [vmem:[%s5 + $0x8] sm:$0xff]
    %v932 = vld [vmem:[%s5 + $0x10] sm:$0xff]
    %v933 = vld [vmem:[%s5 + $0x18] sm:$0xff]
    %v934 = vmul.f32 %v925, %v930
    %v935 = vmul.f32 %v926, %v931
    %v936 = vmul.f32 %v927, %v932
    %v937 = vmul.f32 %v928, %v933
    %v938 = vld [vmem:[%s6] sm:$0x3]
    %vm939 = vcmask 261120
    %v941 = vsel %vm939, %v938, 0
    %943 = vmatprep.subr.mxu0 0.0
    %944 = vmatpush1.msra.mxu0 %v934
    %945 = vmatprep.subr.mxu0 0.0
    %946 = vmatpush1.msra.mxu0 %v935
    %947 = vmatprep.subr.mxu0 0.0
    %948 = vmatpush1.msra.mxu0 %v936
    %949 = vmatprep.subr.mxu0 0.0
    %950 = vmatpush1.msra.mxu0 %v937
    %951 = vmatprep.subr.mxu0 0.0
    %952 = vmatpush1.msra.mxu0 0.0
    %953 = vmatprep.subr.mxu0 0.0
    %954 = vmatpush1.msra.mxu0 0.0
    %955 = vmatprep.subr.mxu0 0.0
    %956 = vmatpush1.msra.mxu0 0.0
    %957 = vmatprep.subr.mxu0 0.0
    %958 = vmatpush1.msra.mxu0 0.0
    %959 = vmatprep.subr.mxu0 0.0
    %960 = vmatpush1.msra.mxu0 0.0
    %961 = vmatprep.subr.mxu0 0.0
    %962 = vmatpush1.msra.mxu0 0.0
    %963 = vmatprep.subr.mxu0 0.0
    %964 = vmatpush1.msra.mxu0 0.0
    %965 = vmatprep.subr.mxu0 0.0
    %966 = vmatpush1.msra.mxu0 0.0
    %967 = vmatprep.subr.mxu0 0.0
    %968 = vmatpush1.msra.mxu0 0.0
    %969 = vmatprep.subr.mxu0 0.0
    %970 = vmatpush1.msra.mxu0 0.0
    %971 = vmatprep.subr.mxu0 0.0
    %972 = vmatpush1.msra.mxu0 0.0
    %973 = vmatprep.subr.mxu0 0.0
    %974 = vmatpush1.msra.mxu0 0.0
    %975 = vmatprep.subr.mxu0 0.0
    %976 = vmatpush1.msra.mxu0 0.0
    %977 = vmatprep.subr.mxu0 0.0
    %978 = vmatpush1.msra.mxu0 0.0
    %979 = vmatprep.subr.mxu0 0.0
    %980 = vmatpush1.msra.mxu0 0.0
    %981 = vmatprep.subr.mxu0 0.0
    %982 = vmatpush1.msra.mxu0 0.0
    %983 = vmatprep.subr.mxu0 0.0
    %984 = vmatpush1.msra.mxu0 0.0
    %985 = vmatprep.subr.mxu0 0.0
    %986 = vmatpush1.msra.mxu0 0.0
    %987 = vmatprep.subr.mxu0 0.0
    %988 = vmatpush1.msra.mxu0 0.0
    %989 = vmatprep.subr.mxu0 0.0
    %990 = vmatpush1.msra.mxu0 0.0
    %991 = vmatprep.subr.mxu0 0.0
    %992 = vmatpush1.msra.mxu0 0.0
    %993 = vmatprep.subr.mxu0 0.0
    %994 = vmatpush1.msra.mxu0 0.0
    %995 = vmatprep.subr.mxu0 0.0
    %996 = vmatpush1.msra.mxu0 0.0
    %997 = vmatprep.subr.mxu0 0.0
    %998 = vmatpush1.msra.mxu0 0.0
    %999 = vmatprep.subr.mxu0 0.0
    %1000 = vmatpush1.msra.mxu0 0.0
    %1001 = vmatprep.subr.mxu0 0.0
    %1002 = vmatpush1.msra.mxu0 0.0
    %1003 = vmatprep.subr.mxu0 0.0
    %1004 = vmatpush1.msra.mxu0 0.0
    %1005 = vmatprep.subr.mxu0 0.0
    %1006 = vmatpush1.msra.mxu0 0.0
    %1007 = vmatprep.mubr.f32.mxu0 0.0
    %1008 = vmatmul.mubr.f32.gmra.mrb[0].mxu0 %v941
    %v1009 = vpop.f32.mrb[0].mxu0
    %v1010 = vadd.f32 0.0, %v1009
    %v1011 = vpop.f32.mrb[0].mxu0
    %1012 = vdwg.mxu0
    %vm1013 = vcmask 123904
    %v1014 = vsel %vm1013, %v1010, 0.0
    %1015 = vadd.xlane.f32.xlu0 %v1014
    %v1016 = vpop.xlane.xlu0 %1015
    %v1017 = vlaneseq
    %v1018 = vshrl.u32 %v1017, 7
    %v1019 = vsub.s32 0, %v1018
    %v1020 = vrot.slane %v929, %v1019
    %v1021 = vadd.f32 %v1016, %v1020
    %vm1022 = vcmask 1024
    %1023 = vst.msk [vmem:[%s7] sm:$0x3] %vm1022, %v1021
  $region33: #{_lambda_.1} parent=0 // pred_fallthru
    _
  // Predicated region
  $region34: #{_lambda_.1} parent=0 // pred_check
    _
  $region35: #{_lambda_.1} parent=0 // pred_check_branch
    %1025 = sbr.rel (0) target = $region37
  $region36: #{_lambda_.1} parent=0 // pred_region
    _
  $region37: #{_lambda_.1} parent=0 // pred_fallthru
    _
  // Predicated region
  $region38: #{_lambda_.1} parent=0 // pred_check
    _
  $region39: #{_lambda_.1} parent=0 // pred_check_branch
    %1027 = sbr.rel (0) target = $region41
  $region40: #{_lambda_.1} parent=0 // pred_region
    _
  $region41: #{_lambda_.1} parent=0 // pred_fallthru
    _

</llo_original>
